<compile_context>
chip_gen: v6e
topology: v6e:2x2x1
jax: 0.10.0
libtpu: 0.0.40
codegen_flags: <defaults>
</compile_context>

<pallas_src>
import functools
import math

import jax
import jax.numpy as jnp
from jax import lax
from jax.experimental import pallas as pl
from jax.experimental.pallas import tpu as pltpu
from jax.scipy import special as jsp_special

_HALF_LOG_2PI = 0.91893853320467274
_SHIFT = 4  # z = x + 4 >= 5 on this domain (x >= 1); series truncation ~1e-8.


def _lgamma_digamma(x):
    """lgamma(x) and digamma(x) for x >= 1 (f32).

    Recurrence-shift by _SHIFT, then the Stirling asymptotic series.  The
    shift corrections are folded into a single log and a single divide of the
    running product x(x+1)...(x+_SHIFT-1) (telescoped numerator for the
    harmonic sum), so the per-element transcendental cost is
    ~ 2 logs + 1 divide + 1 approx-reciprocal instead of ~14 EUP ops.
    """
    prod = x
    num = jnp.ones_like(x)            # running numerator of sum_i 1/(x+i)
    xs = x
    for _ in range(_SHIFT - 1):       # static unroll, pure VPU mul/add
        xs = xs + 1.0
        num = num * xs + prod
        prod = prod * xs
    z = xs + 1.0                      # z = x + _SHIFT
    corr_lg = jnp.log(prod)           # = sum_i log(x+i)
    corr_dg = num / prod              # = sum_i 1/(x+i)   (exact: O(1) magnitude)

    lz = jnp.log(z)
    inv = pl.reciprocal(z, approx=True)   # only scales small correction terms
    inv2 = inv * inv
    lgamma = ((z - 0.5) * lz - z + _HALF_LOG_2PI
              + inv * (1.0 / 12.0 - inv2 * (1.0 / 360.0 - inv2 * (1.0 / 1260.0)))
              - corr_lg)
    digamma = (lz - 0.5 * inv
               - inv2 * (1.0 / 12.0 - inv2 * (1.0 / 120.0 - inv2 * (1.0 / 252.0)))
               - corr_dg)
    return lgamma, digamma


def _dirichlet_kernel(coef_ref, tgt_ref, logits_ref, out_ref, *, lgamma_n_classes):
    """Dirichlet MSE loss for one (branch, batch-tile) grid point.

    coef_ref   : (1,) f32 SMEM       annealing coefficient min(1, step/anneal)
    tgt_ref    : (1, TB) int32 VMEM  integer targets (batch on lanes)
    logits_ref : (C, TB) VMEM        this branch's logits, classes on sublanes
    out_ref    : (8, TB) f32 VMEM    per-sample loss sums accumulated across the
                                     batch-tile ("arbitrary") grid axis; all 8
                                     sublane rows carry the same value so every
                                     store stays unmasked / lane-dense.
    """
    bt = pl.program_id(1)

    @pl.when(bt == 0)
    def _init():
        out_ref[...] = jnp.zeros_like(out_ref)

    c, tb = logits_ref.shape
    coef = coef_ref[0]                                        # SMEM scalar
    lg = logits_ref[...].astype(jnp.float32)                  # native-dtype DMA
    tgt = tgt_ref[...]                                        # (1, TB) int32
    class_ids = lax.broadcasted_iota(jnp.int32, (c, tb), 0)
    onehot = class_ids == tgt                                 # (C, TB) bool
    pf = onehot.astype(jnp.float32)                           # one-hot p

    alpha = jnp.maximum(lg, 0.0) + 1.0                        # evidence + 1 >= 1
    S = jnp.sum(alpha, axis=0, keepdims=True)                 # (1, TB)
    inv_S = 1.0 / S
    m = alpha * inv_S
    d = pf - m
    a_sum = jnp.sum(d * d, axis=0, keepdims=True)             # (1, TB)
    b_sum = (jnp.sum(alpha * (S - alpha), axis=0, keepdims=True)
             * (inv_S * inv_S) / (S + 1.0))                   # (1, TB)

    # KL( Dir(alp) || Dir(1,...,1) ) with alp = E*(1-p)+1 (= 1 at the target
    # class, alpha elsewhere; all >= 1).  beta == 1 is folded at compile time.
    alp = jnp.where(onehot, 1.0, alpha)                       # (C, TB)
    S_alp = jnp.sum(alp, axis=0, keepdims=True)               # (1, TB)
    lg_alp, dg_alp = _lgamma_digamma(alp)                     # lane-dense series
    lg_S, dg_S = _lgamma_digamma(S_alp)                       # (1, TB) row only
    # TODO(synk): concatenating S_alp as one extra sublane row of alp and doing
    # a single fused series call would shave another ~1/3 of the EUP work if
    # unaligned sublane concatenation lowers cleanly on the target toolchain.
    kl_sum = (jnp.sum((alp - 1.0) * (dg_alp - dg_S) - lg_alp, axis=0, keepdims=True)
              + lg_S - lgamma_n_classes)                      # (1, TB)

    row = a_sum + b_sum + coef * kl_sum                       # per-sample losses
    out_ref[...] = out_ref[...] + row                         # broadcast to 8 rows


def _pick_batch_tile(batch, n_classes, logits_dtype, batch_tile=None):
    if batch_tile is not None:
        assert batch % batch_tile == 0
        assert batch_tile % 128 == 0 or batch_tile == batch
        return batch_tile
    if batch <= 1024:
        return batch    # single tile: amortizes the ~0.35us per-grid-step overhead
    # Budget: double-buffered logits DMA (real dtype width) + ~8 f32 in-kernel
    # temporaries of shape (C, TB); stay well inside v7x's 32 MiB scoped VMEM.
    # TODO(synk): on v5e/v6e (128 MiB VMEM) a larger budget + vmem_limit_bytes
    # bump would allow bigger tiles for very wide n_classes; irrelevant at C~10.
    per_col = (2 * n_classes * jnp.dtype(logits_dtype).itemsize
               + 8 * (n_classes + 1) * 4)
    max_tb = max(128, (24 * 1024 * 1024) // per_col)
    for cand in (1024, 896, 768, 640, 512, 384, 256, 128):
        if cand <= max_tb and batch % cand == 0:
            return cand
    # TODO(synk): ragged batches (no 128-multiple divisor) would need per-lane
    # masking; fall back to a single full-batch tile.
    return batch


def _branch_dirichlet_sums(logits_list, targets, coef, n_classes, batch_tile=None):
    """(n_branches,) f32: per-branch sums over the batch of per-sample
    Dirichlet MSE losses (divide by batch size outside for the mean)."""
    n_branches = len(logits_list)
    batch, c = logits_list[0].shape
    assert c == n_classes, "logits class dim must match n_classes"

    tb = _pick_batch_tile(batch, c, logits_list[0].dtype, batch_tile)
    num_tiles = batch // tb

    # Lane-dense layout: batch on the 128-wide lane axis, classes on sublanes.
    # The stack/transpose copy is tiny next to the transcendental compute.
    logits = jnp.transpose(jnp.stack(logits_list, axis=0), (0, 2, 1))  # (n, C, B)
    tgt = targets.reshape(1, batch).astype(jnp.int32)
    coef_arr = jnp.asarray(coef, dtype=jnp.float32).reshape((1,))

    kernel = functools.partial(
        _dirichlet_kernel, lgamma_n_classes=float(math.lgamma(n_classes)))

    per_lane = pl.pallas_call(
        kernel,
        out_shape=jax.ShapeDtypeStruct((n_branches, 8, tb), jnp.float32),
        grid=(n_branches, num_tiles),
        in_specs=[
            pl.BlockSpec(memory_space=pltpu.MemorySpace.SMEM),        # coef scalar
            pl.BlockSpec((1, tb), lambda br, bt: (0, bt)),            # targets
            pl.BlockSpec((None, c, tb), lambda br, bt: (br, 0, bt)),  # logits
        ],
        # One 8-sublane-aligned accumulator slab per branch (disjoint HBM tiles
        # -> safe with the parallel branch axis on v7x's two TensorCores).
        out_specs=pl.BlockSpec((None, 8, tb), lambda br, bt: (br, 0, 0)),
        compiler_params=pltpu.CompilerParams(
            dimension_semantics=("parallel", "arbitrary")),
    )(coef_arr, tgt, logits)

    # Final cross-lane reduce of the lane-dense partial sums (tiny, done in XLA).
    return jnp.sum(per_lane[:, 0, :], axis=-1)                # (n_branches,)


def get_branch_weights(weights, n_branches, **kwargs):
    if weights == "even":
        return jnp.full((n_branches,), 1.0 / n_branches, dtype=jnp.float32)
    elif weights == "weighted-final":
        final_weight = kwargs["final_weight"]
        other = (1.0 - final_weight) / (n_branches - 1)
        w = jnp.full((n_branches,), other, dtype=jnp.float32)
        return w.at[-1].set(final_weight)
    elif weights == "custom":
        w = jnp.asarray(kwargs["weightings"], dtype=jnp.float32)
        assert w.shape[0] == n_branches
        return w
    else:
        return jnp.full((n_branches,), 1.0 / n_branches, dtype=jnp.float32)


class BranchDirichletLoss:
    """JAX/Pallas port of branch_dirichlet_loss (forward pass only)."""

    def __init__(self, weights="even", n_branches=4, n_classes=10,
                 global_step=0, annealing_step=1000, batch_tile=None, **kwargs):
        self.n_classes = n_classes
        self.n_branches = n_branches
        self.annealing_step = annealing_step
        self.global_step = global_step
        self.batch_tile = batch_tile
        self.weighting = get_branch_weights(weights, n_branches, **kwargs)
        # beta is the module's all-ones buffer; the kernel folds beta == 1
        # (lgamma(1) = 0, sum(beta) = n_classes) as compile-time constants.
        self.beta = jnp.ones((1, n_classes), dtype=jnp.float32)
        self.init_loss = jnp.array([0.0], dtype=jnp.float32)

    def __call__(self, outputs, target):
        assert len(outputs) == self.n_branches
        batch = target.shape[0]
        coef = min(1.0, float(self.global_step) / float(self.annealing_step))
        sums = _branch_dirichlet_sums(outputs, target, coef, self.n_classes,
                                      batch_tile=self.batch_tile)     # (n_branches,)
        branch_losses = sums / jnp.float32(batch)                     # batch mean
        losses = [branch_losses[i] for i in range(self.n_branches)]
        loss = self.init_loss + jnp.sum(self.weighting * branch_losses)  # shape (1,)
        # TODO(synk): global_step bookkeeping stays host-side Python state,
        # mirroring the PyTorch module's attribute update.
        self.global_step = self.global_step + 1
        return loss, losses

    def get_probs(self, output):
        probs = []
        for branch_logits in output:
            alpha = jnp.maximum(branch_logits, 0.0) + 1.0
            S = jnp.sum(alpha, axis=1, keepdims=True)
            probs.append(alpha / S)
        return probs


def _reference(logits_list, target, weighting, n_classes, global_step, annealing_step):
    """Plain-JAX mirror of the PyTorch module for a sanity check."""
    beta = jnp.ones((1, n_classes), jnp.float32)

    def kl(alpha):
        S_alpha = jnp.sum(alpha, axis=1, keepdims=True)
        S_beta = jnp.sum(beta, axis=1, keepdims=True)
        lnB = (jsp_special.gammaln(S_alpha)
               - jnp.sum(jsp_special.gammaln(alpha), axis=1, keepdims=True))
        lnB_uni = (jnp.sum(jsp_special.gammaln(beta), axis=1, keepdims=True)
                   - jsp_special.gammaln(S_beta))
        dg0 = jsp_special.digamma(S_alpha)
        dg1 = jsp_special.digamma(alpha)
        return jnp.sum((alpha - beta) * (dg1 - dg0), axis=1, keepdims=True) + lnB + lnB_uni

    def dmse(alpha):
        p = jax.nn.one_hot(target, n_classes, dtype=jnp.float32)
        S = jnp.sum(alpha, axis=1, keepdims=True)
        E = alpha - 1.0
        m = alpha / S
        A = jnp.sum((p - m) ** 2, axis=1, keepdims=True)
        B = jnp.sum(alpha * (S - alpha) / (S * S * (S + 1.0)), axis=1, keepdims=True)
        coef = min(1.0, global_step / annealing_step)
        alp = E * (1.0 - p) + 1.0
        C = coef * kl(alp)
        return jnp.mean(A + B + C)

    branch = jnp.stack(
        [dmse(jnp.maximum(l.astype(jnp.float32), 0.0) + 1.0) for l in logits_list])
    return jnp.sum(weighting * branch), branch


if __name__ == "__main__":
    key = jax.random.PRNGKey(0)
    n_branches, B, C = 4, 256, 10
    keys = jax.random.split(key, n_branches + 1)
    logits = [jax.random.normal(keys[i], (B, C), dtype=jnp.float32)
              for i in range(n_branches)]
    target = jax.random.randint(keys[-1], (B,), 0, C, dtype=jnp.int32)

    # global_step=500 / annealing_step=1000 -> annealing coef 0.5 (KL path live).
    ref_loss, ref_branch = _reference(
        logits, target, get_branch_weights("even", n_branches), C,
        global_step=500, annealing_step=1000)
    ref_loss = jax.block_until_ready(ref_loss)

    # Config 1: default tiling -> a single 256-lane batch tile per branch.
    mod = BranchDirichletLoss(weights="even", n_branches=n_branches, n_classes=C,
                              global_step=500, annealing_step=1000)
    loss, losses = mod(logits, target)
    loss = jax.block_until_ready(loss)
    losses = [jax.block_until_ready(l) for l in losses]
    assert loss.shape == (1,)
    assert len(losses) == n_branches
    assert mod.global_step == 501
    assert jnp.allclose(loss[0], ref_loss, atol=1e-3, rtol=1e-3), (loss, ref_loss)
    assert jnp.allclose(jnp.stack(losses), ref_branch, atol=1e-3, rtol=1e-3), (
        losses, ref_branch)

    # Config 2: explicit 128-lane batch tiles -> 2 reduction steps per branch,
    # exercising the cross-tile accumulation path and the parallel branch grid.
    mod2 = BranchDirichletLoss(weights="even", n_branches=n_branches, n_classes=C,
                               global_step=500, annealing_step=1000, batch_tile=128)
    loss2, losses2 = mod2(logits, target)
    loss2 = jax.block_until_ready(loss2)
    assert jnp.allclose(loss2[0], ref_loss, atol=1e-3, rtol=1e-3), (loss2, ref_loss)
    assert jnp.allclose(jnp.stack(losses2), ref_branch, atol=1e-3, rtol=1e-3), (
        losses2, ref_branch)

    print("KERNEL_OK")
</pallas_src>

<mosaic_0001>
module attributes {stable_mosaic.version = 11 : i64} {
  func.func @_dirichlet_kernel(%arg0: i32, %arg1: i32, %arg2: memref<1xf32, #tpu.memory_space<smem>>, %arg3: memref<1x256xi32, #tpu.memory_space<vmem>>, %arg4: memref<1x10x256xf32, #tpu.memory_space<vmem>>, %arg5: memref<1x8x256xf32, #tpu.memory_space<vmem>>) attributes {dimension_semantics = [#tpu.dimension_semantics<parallel>, #tpu.dimension_semantics<arbitrary>], iteration_bounds = array<i64: 4, 1>, scalar_prefetch = 0 : i64, scratch_operands = 0 : i64, tpu.core_type = #tpu.core_type<tc>, window_params = [{transform_indices = @transform_0, window_bounds = array<i64: 1>}, {transform_indices = @transform_1, window_bounds = array<i64: 1, 256>}, {transform_indices = @transform_2, window_bounds = array<i64: 1, 10, 256>}, {transform_indices = @transform_3, window_bounds = array<i64: 1, 8, 256>}]} {
    %c0_i32 = arith.constant 0 : i32
    %0 = arith.cmpi eq, %arg1, %c0_i32 : i32
    %1 = arith.extui %0 : i1 to i32
    %c0_i32_0 = arith.constant 0 : i32
    %2 = arith.cmpi ne, %1, %c0_i32_0 : i32
    scf.if %2 {
      %cst_51 = arith.constant 0.000000e+00 : f32
      %166 = vector.broadcast %cst_51 : f32 to vector<8x256xf32>
      %c0_52 = arith.constant 0 : index
      %c0_53 = arith.constant 0 : index
      %c0_54 = arith.constant 0 : index
      %167 = vector.load %arg5[%c0_52, %c0_53, %c0_54] : memref<1x8x256xf32, #tpu.memory_space<vmem>>, vector<1x8x256xf32>
      %168 = vector.shape_cast %167 : vector<1x8x256xf32> to vector<8x256xf32>
      %169 = vector.shape_cast %166 : vector<8x256xf32> to vector<1x8x256xf32>
      tpu.vector_store %arg5[%c0_52, %c0_53, %c0_54], %169 {strides = array<i32>} : memref<1x8x256xf32, #tpu.memory_space<vmem>>, vector<1x8x256xf32>,
    } else {
    }
    %c0 = arith.constant 0 : index
    %3 = memref.load %arg2[%c0] : memref<1xf32, #tpu.memory_space<smem>>
    %c0_1 = arith.constant 0 : index
    %c0_2 = arith.constant 0 : index
    %c0_3 = arith.constant 0 : index
    %4 = vector.load %arg4[%c0_1, %c0_2, %c0_3] : memref<1x10x256xf32, #tpu.memory_space<vmem>>, vector<1x10x256xf32>
    %5 = vector.shape_cast %4 : vector<1x10x256xf32> to vector<10x256xf32>
    %c0_4 = arith.constant 0 : index
    %c0_5 = arith.constant 0 : index
    %6 = vector.load %arg3[%c0_4, %c0_5] : memref<1x256xi32, #tpu.memory_space<vmem>>, vector<1x256xi32>
    %7 = tpu.iota {dimensions = array<i32: 0>} : vector<10x256xi32>
    %8 = vector.broadcast %6 : vector<1x256xi32> to vector<10x256xi32>
    %9 = arith.cmpi eq, %7, %8 : vector<10x256xi32>
    %10 = arith.extui %9 : vector<10x256xi1> to vector<10x256xi32>
    %11 = arith.sitofp %10 : vector<10x256xi32> to vector<10x256xf32>
    %cst = arith.constant 0.000000e+00 : f32
    %12 = vector.broadcast %cst : f32 to vector<10x256xf32>
    %13 = arith.maximumf %5, %12 : vector<10x256xf32>
    %cst_6 = arith.constant 1.000000e+00 : f32
    %14 = vector.broadcast %cst_6 : f32 to vector<10x256xf32>
    %15 = arith.addf %13, %14 : vector<10x256xf32>
    %cst_7 = arith.constant dense<0.000000e+00> : vector<256xf32>
    %16 = vector.multi_reduction <add>, %15, %cst_7 [0] : vector<10x256xf32> to vector<256xf32>
    %17 = vector.shape_cast %16 : vector<256xf32> to vector<1x256xf32>
    %cst_8 = arith.constant 1.000000e+00 : f32
    %18 = vector.broadcast %cst_8 : f32 to vector<1x256xf32>
    %19 = arith.divf %18, %17 : vector<1x256xf32>
    %20 = vector.broadcast %19 : vector<1x256xf32> to vector<10x256xf32>
    %21 = arith.mulf %15, %20 : vector<10x256xf32>
    %22 = arith.subf %11, %21 : vector<10x256xf32>
    %23 = arith.mulf %22, %22 : vector<10x256xf32>
    %cst_9 = arith.constant dense<0.000000e+00> : vector<256xf32>
    %24 = vector.multi_reduction <add>, %23, %cst_9 [0] : vector<10x256xf32> to vector<256xf32>
    %25 = vector.shape_cast %24 : vector<256xf32> to vector<1x256xf32>
    %26 = vector.broadcast %17 : vector<1x256xf32> to vector<10x256xf32>
    %27 = arith.subf %26, %15 : vector<10x256xf32>
    %28 = arith.mulf %15, %27 : vector<10x256xf32>
    %cst_10 = arith.constant dense<0.000000e+00> : vector<256xf32>
    %29 = vector.multi_reduction <add>, %28, %cst_10 [0] : vector<10x256xf32> to vector<256xf32>
    %30 = vector.shape_cast %29 : vector<256xf32> to vector<1x256xf32>
    %31 = arith.mulf %19, %19 : vector<1x256xf32>
    %32 = arith.mulf %30, %31 : vector<1x256xf32>
    %cst_11 = arith.constant 1.000000e+00 : f32
    %33 = vector.broadcast %cst_11 : f32 to vector<1x256xf32>
    %34 = arith.addf %17, %33 : vector<1x256xf32>
    %35 = arith.divf %32, %34 : vector<1x256xf32>
    %cst_12 = arith.constant 1.000000e+00 : f32
    %36 = vector.broadcast %cst_12 : f32 to vector<10x256xf32>
    %37 = arith.select %9, %36, %15 : vector<10x256xi1>, vector<10x256xf32>
    %cst_13 = arith.constant dense<0.000000e+00> : vector<256xf32>
    %38 = vector.multi_reduction <add>, %37, %cst_13 [0] : vector<10x256xf32> to vector<256xf32>
    %39 = vector.shape_cast %38 : vector<256xf32> to vector<1x256xf32>
    %cst_14 = arith.constant 1.000000e+00 : f32
    %40 = vector.broadcast %cst_14 : f32 to vector<10x256xf32>
    %cst_15 = arith.constant 1.000000e+00 : f32
    %41 = vector.broadcast %cst_15 : f32 to vector<10x256xf32>
    %42 = arith.addf %37, %41 : vector<10x256xf32>
    %43 = arith.mulf %40, %42 : vector<10x256xf32>
    %44 = arith.addf %43, %37 : vector<10x256xf32>
    %45 = arith.mulf %37, %42 : vector<10x256xf32>
    %cst_16 = arith.constant 1.000000e+00 : f32
    %46 = vector.broadcast %cst_16 : f32 to vector<10x256xf32>
    %47 = arith.addf %42, %46 : vector<10x256xf32>
    %48 = arith.mulf %44, %47 : vector<10x256xf32>
    %49 = arith.addf %48, %45 : vector<10x256xf32>
    %50 = arith.mulf %45, %47 : vector<10x256xf32>
    %cst_17 = arith.constant 1.000000e+00 : f32
    %51 = vector.broadcast %cst_17 : f32 to vector<10x256xf32>
    %52 = arith.addf %47, %51 : vector<10x256xf32>
    %53 = arith.mulf %49, %52 : vector<10x256xf32>
    %54 = arith.addf %53, %50 : vector<10x256xf32>
    %55 = arith.mulf %50, %52 : vector<10x256xf32>
    %cst_18 = arith.constant 1.000000e+00 : f32
    %56 = vector.broadcast %cst_18 : f32 to vector<10x256xf32>
    %57 = arith.addf %52, %56 : vector<10x256xf32>
    %58 = math.log %55 : vector<10x256xf32>
    %59 = arith.divf %54, %55 : vector<10x256xf32>
    %60 = math.log %57 : vector<10x256xf32>
    %61 = tpu.reciprocal %57 {approx = true} : vector<10x256xf32> -> vector<10x256xf32>
    %62 = arith.mulf %61, %61 : vector<10x256xf32>
    %cst_19 = arith.constant 5.000000e-01 : f32
    %63 = vector.broadcast %cst_19 : f32 to vector<10x256xf32>
    %64 = arith.subf %57, %63 : vector<10x256xf32>
    %65 = arith.mulf %64, %60 : vector<10x256xf32>
    %66 = arith.subf %65, %57 : vector<10x256xf32>
    %cst_20 = arith.constant 0.918938517 : f32
    %67 = vector.broadcast %cst_20 : f32 to vector<10x256xf32>
    %68 = arith.addf %66, %67 : vector<10x256xf32>
    %cst_21 = arith.constant 7.93650805E-4 : f32
    %69 = vector.broadcast %cst_21 : f32 to vector<10x256xf32>
    %70 = arith.mulf %62, %69 : vector<10x256xf32>
    %cst_22 = arith.constant 0.00277777785 : f32
    %71 = vector.broadcast %cst_22 : f32 to vector<10x256xf32>
    %72 = arith.subf %71, %70 : vector<10x256xf32>
    %73 = arith.mulf %62, %72 : vector<10x256xf32>
    %cst_23 = arith.constant 0.0833333358 : f32
    %74 = vector.broadcast %cst_23 : f32 to vector<10x256xf32>
    %75 = arith.subf %74, %73 : vector<10x256xf32>
    %76 = arith.mulf %61, %75 : vector<10x256xf32>
    %77 = arith.addf %68, %76 : vector<10x256xf32>
    %78 = arith.subf %77, %58 : vector<10x256xf32>
    %cst_24 = arith.constant 5.000000e-01 : f32
    %79 = vector.broadcast %cst_24 : f32 to vector<10x256xf32>
    %80 = arith.mulf %79, %61 : vector<10x256xf32>
    %81 = arith.subf %60, %80 : vector<10x256xf32>
    %cst_25 = arith.constant 0.0039682542 : f32
    %82 = vector.broadcast %cst_25 : f32 to vector<10x256xf32>
    %83 = arith.mulf %62, %82 : vector<10x256xf32>
    %cst_26 = arith.constant 0.00833333377 : f32
    %84 = vector.broadcast %cst_26 : f32 to vector<10x256xf32>
    %85 = arith.subf %84, %83 : vector<10x256xf32>
    %86 = arith.mulf %62, %85 : vector<10x256xf32>
    %cst_27 = arith.constant 0.0833333358 : f32
    %87 = vector.broadcast %cst_27 : f32 to vector<10x256xf32>
    %88 = arith.subf %87, %86 : vector<10x256xf32>
    %89 = arith.mulf %62, %88 : vector<10x256xf32>
    %90 = arith.subf %81, %89 : vector<10x256xf32>
    %91 = arith.subf %90, %59 : vector<10x256xf32>
    %cst_28 = arith.constant 1.000000e+00 : f32
    %92 = vector.broadcast %cst_28 : f32 to vector<1x256xf32>
    %cst_29 = arith.constant 1.000000e+00 : f32
    %93 = vector.broadcast %cst_29 : f32 to vector<1x256xf32>
    %94 = arith.addf %39, %93 : vector<1x256xf32>
    %95 = arith.mulf %92, %94 : vector<1x256xf32>
    %96 = arith.addf %95, %39 : vector<1x256xf32>
    %97 = arith.mulf %39, %94 : vector<1x256xf32>
    %cst_30 = arith.constant 1.000000e+00 : f32
    %98 = vector.broadcast %cst_30 : f32 to vector<1x256xf32>
    %99 = arith.addf %94, %98 : vector<1x256xf32>
    %100 = arith.mulf %96, %99 : vector<1x256xf32>
    %101 = arith.addf %100, %97 : vector<1x256xf32>
    %102 = arith.mulf %97, %99 : vector<1x256xf32>
    %cst_31 = arith.constant 1.000000e+00 : f32
    %103 = vector.broadcast %cst_31 : f32 to vector<1x256xf32>
    %104 = arith.addf %99, %103 : vector<1x256xf32>
    %105 = arith.mulf %101, %104 : vector<1x256xf32>
    %106 = arith.addf %105, %102 : vector<1x256xf32>
    %107 = arith.mulf %102, %104 : vector<1x256xf32>
    %cst_32 = arith.constant 1.000000e+00 : f32
    %108 = vector.broadcast %cst_32 : f32 to vector<1x256xf32>
    %109 = arith.addf %104, %108 : vector<1x256xf32>
    %110 = math.log %107 : vector<1x256xf32>
    %111 = arith.divf %106, %107 : vector<1x256xf32>
    %112 = math.log %109 : vector<1x256xf32>
    %113 = tpu.reciprocal %109 {approx = true} : vector<1x256xf32> -> vector<1x256xf32>
    %114 = arith.mulf %113, %113 : vector<1x256xf32>
    %cst_33 = arith.constant 5.000000e-01 : f32
    %115 = vector.broadcast %cst_33 : f32 to vector<1x256xf32>
    %116 = arith.subf %109, %115 : vector<1x256xf32>
    %117 = arith.mulf %116, %112 : vector<1x256xf32>
    %118 = arith.subf %117, %109 : vector<1x256xf32>
    %cst_34 = arith.constant 0.918938517 : f32
    %119 = vector.broadcast %cst_34 : f32 to vector<1x256xf32>
    %120 = arith.addf %118, %119 : vector<1x256xf32>
    %cst_35 = arith.constant 7.93650805E-4 : f32
    %121 = vector.broadcast %cst_35 : f32 to vector<1x256xf32>
    %122 = arith.mulf %114, %121 : vector<1x256xf32>
    %cst_36 = arith.constant 0.00277777785 : f32
    %123 = vector.broadcast %cst_36 : f32 to vector<1x256xf32>
    %124 = arith.subf %123, %122 : vector<1x256xf32>
    %125 = arith.mulf %114, %124 : vector<1x256xf32>
    %cst_37 = arith.constant 0.0833333358 : f32
    %126 = vector.broadcast %cst_37 : f32 to vector<1x256xf32>
    %127 = arith.subf %126, %125 : vector<1x256xf32>
    %128 = arith.mulf %113, %127 : vector<1x256xf32>
    %129 = arith.addf %120, %128 : vector<1x256xf32>
    %130 = arith.subf %129, %110 : vector<1x256xf32>
    %cst_38 = arith.constant 5.000000e-01 : f32
    %131 = vector.broadcast %cst_38 : f32 to vector<1x256xf32>
    %132 = arith.mulf %131, %113 : vector<1x256xf32>
    %133 = arith.subf %112, %132 : vector<1x256xf32>
    %cst_39 = arith.constant 0.0039682542 : f32
    %134 = vector.broadcast %cst_39 : f32 to vector<1x256xf32>
    %135 = arith.mulf %114, %134 : vector<1x256xf32>
    %cst_40 = arith.constant 0.00833333377 : f32
    %136 = vector.broadcast %cst_40 : f32 to vector<1x256xf32>
    %137 = arith.subf %136, %135 : vector<1x256xf32>
    %138 = arith.mulf %114, %137 : vector<1x256xf32>
    %cst_41 = arith.constant 0.0833333358 : f32
    %139 = vector.broadcast %cst_41 : f32 to vector<1x256xf32>
    %140 = arith.subf %139, %138 : vector<1x256xf32>
    %141 = arith.mulf %114, %140 : vector<1x256xf32>
    %142 = arith.subf %133, %141 : vector<1x256xf32>
    %143 = arith.subf %142, %111 : vector<1x256xf32>
    %cst_42 = arith.constant 1.000000e+00 : f32
    %144 = vector.broadcast %cst_42 : f32 to vector<10x256xf32>
    %145 = arith.subf %37, %144 : vector<10x256xf32>
    %146 = vector.broadcast %143 : vector<1x256xf32> to vector<10x256xf32>
    %147 = arith.subf %91, %146 : vector<10x256xf32>
    %148 = arith.mulf %145, %147 : vector<10x256xf32>
    %149 = arith.subf %148, %78 : vector<10x256xf32>
    %cst_43 = arith.constant dense<0.000000e+00> : vector<256xf32>
    %150 = vector.multi_reduction <add>, %149, %cst_43 [0] : vector<10x256xf32> to vector<256xf32>
    %151 = vector.shape_cast %150 : vector<256xf32> to vector<1x256xf32>
    %152 = arith.addf %151, %130 : vector<1x256xf32>
    %cst_44 = arith.constant 12.8018274 : f32
    %153 = vector.broadcast %cst_44 : f32 to vector<1x256xf32>
    %154 = arith.subf %152, %153 : vector<1x256xf32>
    %155 = arith.addf %25, %35 : vector<1x256xf32>
    %156 = vector.broadcast %3 : f32 to vector<1x256xf32>
    %157 = arith.mulf %156, %154 : vector<1x256xf32>
    %158 = arith.addf %155, %157 : vector<1x256xf32>
    %c0_45 = arith.constant 0 : index
    %c0_46 = arith.constant 0 : index
    %c0_47 = arith.constant 0 : index
    %159 = vector.load %arg5[%c0_45, %c0_46, %c0_47] : memref<1x8x256xf32, #tpu.memory_space<vmem>>, vector<1x8x256xf32>
    %160 = vector.shape_cast %159 : vector<1x8x256xf32> to vector<8x256xf32>
    %161 = vector.broadcast %158 : vector<1x256xf32> to vector<8x256xf32>
    %162 = arith.addf %160, %161 : vector<8x256xf32>
    %c0_48 = arith.constant 0 : index
    %c0_49 = arith.constant 0 : index
    %c0_50 = arith.constant 0 : index
    %163 = vector.load %arg5[%c0_48, %c0_49, %c0_50] : memref<1x8x256xf32, #tpu.memory_space<vmem>>, vector<1x8x256xf32>
    %164 = vector.shape_cast %163 : vector<1x8x256xf32> to vector<8x256xf32>
    %165 = vector.shape_cast %162 : vector<8x256xf32> to vector<1x8x256xf32>
    tpu.vector_store %arg5[%c0_48, %c0_49, %c0_50], %165 {strides = array<i32>} : memref<1x8x256xf32, #tpu.memory_space<vmem>>, vector<1x8x256xf32>,
    return
  }
  func.func @transform_0(%arg0: i32, %arg1: i32) -> i32 {
    %c0_i32 = arith.constant 0 : i32
    %c0_i32_0 = arith.constant 0 : i32
    return %c0_i32 : i32
  }
  func.func @transform_1(%arg0: i32, %arg1: i32) -> (i32, i32) {
    %c0_i32 = arith.constant 0 : i32
    %c0_i32_0 = arith.constant 0 : i32
    return %c0_i32, %arg1 : i32, i32
  }
  func.func @transform_2(%arg0: i32, %arg1: i32) -> (i32, i32, i32) {
    %c0_i32 = arith.constant 0 : i32
    %c0_i32_0 = arith.constant 0 : i32
    return %arg0, %c0_i32, %arg1 : i32, i32, i32
  }
  func.func @transform_3(%arg0: i32, %arg1: i32) -> (i32, i32, i32) {
    %c0_i32 = arith.constant 0 : i32
    %c0_i32_0 = arith.constant 0 : i32
    %c0_i32_1 = arith.constant 0 : i32
    return %arg0, %c0_i32, %c0_i32_0 : i32, i32, i32
  }
}

</mosaic_0001>

<llo_original>
// kernel: tpu_custom_call.1
$region0: #{tpu_custom_call.1}
  #allocation0 [shape = 'u32[]', space=smem, size = 0x4, offset = 0x4, fixed_abs, tag = 'smem constant byte address 0x4 - core index']
  #allocation1 [shape = 'u32[144,128]{1,0:T(1,128)}', space=vmem, size = 0x12000, scoped, tag = 'internal scratch']
  #allocation2 [shape = 'f32[1]{0:T(128)S(6)}', space=smem, size = 0x200, scoped, tag = 'scoped memory for tpu_custom_call.1']
  %s0 = inlined_call_operand.<no memory space> [shape: f32[1], index: 0, kind: input, shape index: {}]
  %s1 = inlined_call_operand.vmem [shape: s32[1,256], index: 1, kind: input, shape index: {}]
  %s2 = inlined_call_operand.vmem [shape: f32[4,10,256], index: 2, kind: input, shape index: {}]
  %s3 = inlined_call_operand.hbm [shape: f32[4,8,256], index: 3, kind: output, shape index: {}]
  %s4 = sld [smem:[#allocation0]]
  $region49: #{tpu_custom_call.1} parent=0
    _
  %s6 = ssub.s32 1, %s4
  %s7 = scalar_select 0, %s6, %s4
  %8 = sst [smem:[#allocation2]] %s0
  $region1: #{tpu_custom_call.1} parent=0
    #allocation3 [shape = 'u8[16384]{0}', space=vmem, size = 0x4000, scoped, tag = 'output window, operand 0']
    #allocation4 [shape = 's32[2]{0}', space=sflag, size = 0x8, scoped, tag = 'scoped memory for tpu_custom_call.1']
    %9 = vsyncpa [#allocation4], 0
    %s10 = scalar_lea.sflag [#allocation4], 1
    %11 = vsyncpa %s10, 0
    loop: start=0, step=1, limit=6
    $region2: #{tpu_custom_call.1} parent=1 // loop_pre_header
      _
    $region3: #{tpu_custom_call.1} parent=1 // loop_header
      %s13 = sphi 0, %s17
      %p14 = scmp.ge.s32.totalorder %s13, 6
      %s20 = sphi 0, %s32
      %s21 = sphi 0, %s28
      %s22 = sphi 0, %s20
      %s23 = sphi 0, %s21
      %s24 = sphi 0, %s22
      %s25 = sphi 0, %s23
      %s33 = sphi 0, %s33
      %s35 = sphi 0, %s33
      %s36 = sphi 0, %s35
      %s50 = sphi 0, %s36
      %s56 = sphi 0, %s58
      %s59 = sphi 0, %s56
      %s60 = sphi 0, %s59
      %s76 = sphi 0, %s60
      %s84 = sphi 0, %s86
      %s87 = sphi 0, %s84
      %s88 = sphi 0, %s87
      %s104 = sphi 0, %s88
      %s110 = sphi 0, %s112
      %s113 = sphi 0, %s110
      %s114 = sphi 0, %s113
      %s130 = sphi 0, %s114
    $region4: #{tpu_custom_call.1} parent=1 // loop_header_branch
      %16 = sbr.rel (%p14) target = $region8
    $region5: #{tpu_custom_call.1} parent=1 // loop_body
      %s18 = ssub.s32 %s13, 1
      %s19 = ssub.s32 %s13, 2
      %s26 = sadd.s32 1, %s21
      %p27 = scmp.ge.s32.totalorder %s26, 1
      %s28 = scalar_select %p27, 0, %s26
      %s29 = sadd.s32 1, %s20
      %s30 = scalar_select %p27, %s29, %s20
      %p31 = scmp.ge.s32.totalorder %s30, 4
      %s32 = scalar_select %p31, 0, %s30
      %s34 = sadd.s32 %s33, 1
      %p37 = scmp.eq.s32.totalorder %s13, 3
      %p38 = scmp.ne.s32.totalorder %s33, %s35
      %p39 = scmp.eq.s32.totalorder %s13, 0
      %p40 = por %p38, %p39
      %p41 = scmp.ne.s32.totalorder %s33, %s35
      %p42 = scmp.eq.s32.totalorder %s18, 3
      %p43 = por %p41, %p42
      %p44 = scmp.ne.s32.totalorder %s35, %s36
      %p45 = scmp.eq.s32.totalorder %s18, 0
      %p46 = por %p44, %p45
      %p47 = scmp.ne.s32.totalorder %s35, %s36
      %p48 = scmp.eq.s32.totalorder %s19, 3
      %p49 = por %p47, %p48
      %p51 = scmp.ne.s32.totalorder %s36, %s50
      %p52 = scmp.eq.s32.totalorder %s19, 0
      %p53 = por %p51, %p52
      %s54 = ssub.s32 %s21, %s28
      %p55 = scmp.eq.s32.totalorder %s54, 0
      %s57 = sadd.s32 %s56, 1
      %s58 = scalar_select %p55, %s56, %s57
      %p61 = pneg %p55
      %p62 = scmp.eq.s32.totalorder %s13, 3
      %p63 = por %p61, %p62
      %p64 = scmp.ne.s32.totalorder %s56, %s59
      %p65 = scmp.eq.s32.totalorder %s13, 0
      %p66 = por %p64, %p65
      %p67 = scmp.ne.s32.totalorder %s56, %s59
      %p68 = scmp.eq.s32.totalorder %s18, 3
      %p69 = por %p67, %p68
      %p70 = scmp.ne.s32.totalorder %s59, %s60
      %p71 = scmp.eq.s32.totalorder %s18, 0
      %p72 = por %p70, %p71
      %p73 = scmp.ne.s32.totalorder %s59, %s60
      %p74 = scmp.eq.s32.totalorder %s19, 3
      %p75 = por %p73, %p74
      %p77 = scmp.ne.s32.totalorder %s60, %s76
      %p78 = scmp.eq.s32.totalorder %s19, 0
      %p79 = por %p77, %p78
      %s80 = ssub.s32 %s20, %s32
      %s81 = ssub.s32 %s21, %s28
      %s82 = sor.u32 %s80, %s81
      %p83 = scmp.eq.s32.totalorder %s82, 0
      %s85 = sadd.s32 %s84, 1
      %s86 = scalar_select %p83, %s84, %s85
      %p89 = pneg %p83
      %p90 = scmp.eq.s32.totalorder %s13, 3
      %p91 = por %p89, %p90
      %p92 = scmp.ne.s32.totalorder %s84, %s87
      %p93 = scmp.eq.s32.totalorder %s13, 0
      %p94 = por %p92, %p93
      %p95 = scmp.ne.s32.totalorder %s84, %s87
      %p96 = scmp.eq.s32.totalorder %s18, 3
      %p97 = por %p95, %p96
      %p98 = scmp.ne.s32.totalorder %s87, %s88
      %p99 = scmp.eq.s32.totalorder %s18, 0
      %p100 = por %p98, %p99
      %p101 = scmp.ne.s32.totalorder %s87, %s88
      %p102 = scmp.eq.s32.totalorder %s19, 3
      %p103 = por %p101, %p102
      %p105 = scmp.ne.s32.totalorder %s88, %s104
      %p106 = scmp.eq.s32.totalorder %s19, 0
      %p107 = por %p105, %p106
      %s108 = ssub.s32 %s20, %s32
      %p109 = scmp.eq.s32.totalorder %s108, 0
      %s111 = sadd.s32 %s110, 1
      %s112 = scalar_select %p109, %s110, %s111
      %p115 = pneg %p109
      %p116 = scmp.eq.s32.totalorder %s13, 3
      %p117 = por %p115, %p116
      %p118 = scmp.ne.s32.totalorder %s110, %s113
      %p119 = scmp.eq.s32.totalorder %s13, 0
      %p120 = por %p118, %p119
      %p121 = scmp.ne.s32.totalorder %s110, %s113
      %p122 = scmp.eq.s32.totalorder %s18, 3
      %p123 = por %p121, %p122
      %p124 = scmp.ne.s32.totalorder %s113, %s114
      %p125 = scmp.eq.s32.totalorder %s18, 0
      %p126 = por %p124, %p125
      %p127 = scmp.ne.s32.totalorder %s113, %s114
      %p128 = scmp.eq.s32.totalorder %s19, 3
      %p129 = por %p127, %p128
      %p131 = scmp.ne.s32.totalorder %s114, %s130
      %p132 = scmp.eq.s32.totalorder %s19, 0
      %p133 = por %p131, %p132
      %p134 = scmp.le.s32.totalorder 1, %s13
      %p135 = scmp.lt.s32.totalorder %s13, 5
      %p136 = pnand %p134, %p135
      %p137 = pneg %p136
      // Predicated region
      $region9: #{tpu_custom_call.1} parent=5 // pred_check
        _
      $region10: #{tpu_custom_call.1} parent=5 // pred_check_branch
        %139 = sbr.rel (%p136) target = $region12
      $region11: #{tpu_custom_call.1} parent=5 // pred_region
        %s140 = ssub.s32 %s13, 1
        // Predicated region
        $region13: #{tpu_custom_call.1} parent=11 // pred_check
          %p141 = pneg %p46
        $region14: #{tpu_custom_call.1} parent=11 // pred_check_branch
          %143 = sbr.rel (%p141) target = $region16
        $region15: #{tpu_custom_call.1} parent=11 // pred_region
          _
        $region16: #{tpu_custom_call.1} parent=11 // pred_fallthru
          _
        // Predicated region
        $region17: #{tpu_custom_call.1} parent=11 // pred_check
          %p144 = pneg %p72
        $region18: #{tpu_custom_call.1} parent=11 // pred_check_branch
          %146 = sbr.rel (%p144) target = $region20
        $region19: #{tpu_custom_call.1} parent=11 // pred_region
          %s147 = smul.u32 2, %s23
          %p148 = scmp.lt.s32.totalorder %s147, 1
          %s149 = scalar_select %p148, %s147, 1
          %s150 = scalar_lea.vmem %s1, %s149
          %s151 = smul.u32 2, %s23
        $region20: #{tpu_custom_call.1} parent=11 // pred_fallthru
          _
      $region12: #{tpu_custom_call.1} parent=5 // pred_fallthru
        _
      %p152 = scmp.lt.s32.totalorder %s13, 4
      // Predicated region
      $region21: #{tpu_custom_call.1} parent=5 // pred_check
        %p153 = pneg %p152
      $region22: #{tpu_custom_call.1} parent=5 // pred_check_branch
        %155 = sbr.rel (%p153) target = $region24
      $region23: #{tpu_custom_call.1} parent=5 // pred_region
        // Predicated region
        $region25: #{tpu_custom_call.1} parent=23 // pred_check
          %p156 = pneg %p94
        $region26: #{tpu_custom_call.1} parent=23 // pred_check_branch
          %158 = sbr.rel (%p156) target = $region28
        $region27: #{tpu_custom_call.1} parent=23 // pred_region
          %s159 = smul.u32 2, %s21
          %p160 = scmp.lt.s32.totalorder %s20, 3
          %s161 = scalar_select %p160, %s20, 3
          %p162 = scmp.lt.s32.totalorder %s159, 1
          %s163 = scalar_select %p162, %s159, 1
          %s164 = smul.addr %s161, 4
          %s165 = sadd.s32 %s163, %s164
          %s166 = smul.addr %s165, 8
          %s167 = scalar_lea.vmem %s2, %s166
          %s168 = smul.u32 2, %s21
        $region28: #{tpu_custom_call.1} parent=23 // pred_fallthru
          _
      $region24: #{tpu_custom_call.1} parent=5 // pred_fallthru
        _
      %p169 = scmp.le.s32.totalorder 1, %s13
      %p170 = scmp.lt.s32.totalorder %s13, 5
      %p171 = pnand %p169, %p170
      %p172 = pneg %p171
      // Predicated region
      $region29: #{tpu_custom_call.1} parent=5 // pred_check
        _
      $region30: #{tpu_custom_call.1} parent=5 // pred_check_branch
        %174 = sbr.rel (%p171) target = $region32
      $region31: #{tpu_custom_call.1} parent=5 // pred_region
        %s175 = ssub.s32 %s13, 1
        %p176 = pneg %p46
        %p177 = pneg %p43
        %s178 = smul.u32 2, %s23
        %p179 = scmp.lt.s32.totalorder %s178, 1
        %s180 = scalar_select %p179, %s178, 1
        %s181 = scalar_lea.vmem %s1, %s180
        %p182 = pneg %p72
        %p183 = pneg %p69
        %s184 = smul.u32 2, %s23
        %p185 = scmp.lt.s32.totalorder %s22, 3
        %s186 = scalar_select %p185, %s22, 3
        %p187 = scmp.lt.s32.totalorder %s184, 1
        %s188 = scalar_select %p187, %s184, 1
        %s189 = smul.addr %s186, 4
        %s190 = sadd.s32 %s188, %s189
        %s191 = smul.addr %s190, 8
        %s192 = scalar_lea.vmem %s2, %s191
        %p193 = pneg %p100
        %p194 = pneg %p97
        %p195 = pneg %p126
        %p196 = pneg %p123
        %s197 = sand.u32 %s113, 1
        %s198 = scalar_lea.sflag [#allocation4], %s197
        %s199 = sand.u32 %s113, 1
        %s200 = smul.addr %s199, 16
        %s201 = scalar_lea.vmem [#allocation3], %s200
        %s202 = smul.u32 2, %s23
        %p203 = scmp.lt.s32.totalorder %s202, 1
        %s204 = scalar_select %p203, %s202, 1
        %s205 = scalar_lea.vmem %s1, %s204
        %s206 = smul.u32 2, %s23
        %s207 = smul.u32 2, %s23
        %p208 = scmp.lt.s32.totalorder %s22, 3
        %s209 = scalar_select %p208, %s22, 3
        %p210 = scmp.lt.s32.totalorder %s207, 1
        %s211 = scalar_select %p210, %s207, 1
        %s212 = smul.addr %s209, 4
        %s213 = sadd.s32 %s211, %s212
        %s214 = smul.addr %s213, 8
        %s215 = scalar_lea.vmem %s2, %s214
        %s216 = smul.u32 2, %s23
        %p217 = scmp.eq.s32.totalorder %s23, 0
        // Predicated region
        $region33: #{tpu_custom_call.1} parent=31 // pred_check
          %p218 = pneg %p217
        $region34: #{tpu_custom_call.1} parent=31 // pred_check_branch
          %220 = sbr.rel (%p218) target = $region36
        $region35: #{tpu_custom_call.1} parent=31 // pred_region
          %221 = vst [vmem:[%s201] sm:$0xff] 0.0
          %222 = vst [vmem:[%s201 + $0x8] sm:$0xff] 0.0
        $region36: #{tpu_custom_call.1} parent=31 // pred_fallthru
          _
        %s223 = sld [smem:[#allocation2]]
        %v224 = vld [vmem:[%s215] sm:$0xff]
        %v225 = vld [vmem:[%s215 + $0x8] sm:$0xff]
        %v226 = vld [vmem:[%s215 + $0x10] sm:$0x3]
        %v227 = vld [vmem:[%s215 + $0x18] sm:$0x3]
        %v228 = vld [vmem:[%s205] sm:$0x3]
        %v229 = vlaneseq
        %v230 = vshrl.u32 %v229, 7
        %v231 = vadd.s32 %v230, 8
        %v232 = vlaneseq
        %v233 = vshrl.u32 %v232, 7
        %v234 = vsub.s32 0, %v233
        %v235 = vrot.slane %v228, %v234
        %v236 = vlaneseq
        %v237 = vshrl.u32 %v236, 7
        %v238 = vsub.s32 1, %v237
        %v239 = vrot.slane %v228, %v238
        %vm240 = vcmp.eq.s32.totalorder %v230, %v235
        %vm241 = vcmp.eq.s32.totalorder %v230, %v239
        %vm242 = vcmp.eq.s32.totalorder %v231, %v235
        %vm243 = vcmp.eq.s32.totalorder %v231, %v239
        %v244 = vsel %vm240, 1, 0
        %v245 = vsel %vm241, 1, 0
        %v246 = vsel %vm242, 1, 0
        %v247 = vsel %vm243, 1, 0
        %v248 = vcvt.s32.f32 %v244
        %v249 = vcvt.s32.f32 %v245
        %v250 = vcvt.s32.f32 %v246
        %v251 = vcvt.s32.f32 %v247
        %v252 = vmax.f32 %v224, 0.0
        %v253 = vmax.f32 %v225, 0.0
        %v254 = vmax.f32 %v226, 0.0
        %v255 = vmax.f32 %v227, 0.0
        %v256 = vadd.f32 %v252, 1.0
        %v257 = vadd.f32 %v253, 1.0
        %v258 = vadd.f32 %v254, 1.0
        %v259 = vadd.f32 %v255, 1.0
        %vm260 = vcmask 1041408
        %v261 = vsel %vm260, %v258, 0.0
        %v262 = vadd.f32 %v256, %v261
        %v263 = vrot.slane %v262, 4
        %v264 = vadd.f32 %v262, %v263
        %v265 = vrot.slane %v264, 2
        %v266 = vadd.f32 %v264, %v265
        %v267 = vrot.slane %v266, 1
        %v268 = vadd.f32 %v266, %v267
        %v269 = vsel %vm260, %v259, 0.0
        %v270 = vadd.f32 %v257, %v269
        %v271 = vrot.slane %v270, 4
        %v272 = vadd.f32 %v270, %v271
        %v273 = vrot.slane %v272, 2
        %v274 = vadd.f32 %v272, %v273
        %v275 = vrot.slane %v274, 1
        %v276 = vadd.f32 %v274, %v275
        %v277 = vrcp.pop %v268
        %v278 = vmul.f32 1.0, %v277
        %v279 = vrcp.pop %v276
        %v280 = vmul.f32 1.0, %v279
        %v281 = vmul.f32 %v256, %v278
        %v282 = vmul.f32 %v257, %v280
        %v283 = vmul.f32 %v258, %v278
        %v284 = vmul.f32 %v259, %v280
        %v285 = vsub.f32 %v248, %v281
        %v286 = vsub.f32 %v249, %v282
        %v287 = vsub.f32 %v250, %v283
        %v288 = vsub.f32 %v251, %v284
        %v289 = vmul.f32 %v285, %v285
        %v290 = vmul.f32 %v286, %v286
        %v291 = vmul.f32 %v287, %v287
        %v292 = vmul.f32 %v288, %v288
        %v293 = vsel %vm260, %v291, 0.0
        %v294 = vadd.f32 %v289, %v293
        %v295 = vrot.slane %v294, 4
        %v296 = vadd.f32 %v294, %v295
        %v297 = vrot.slane %v296, 2
        %v298 = vadd.f32 %v296, %v297
        %v299 = vrot.slane %v298, 1
        %v300 = vadd.f32 %v298, %v299
        %v301 = vsel %vm260, %v292, 0.0
        %v302 = vadd.f32 %v290, %v301
        %v303 = vrot.slane %v302, 4
        %v304 = vadd.f32 %v302, %v303
        %v305 = vrot.slane %v304, 2
        %v306 = vadd.f32 %v304, %v305
        %v307 = vrot.slane %v306, 1
        %v308 = vadd.f32 %v306, %v307
        %v309 = vsub.f32 %v268, %v256
        %v310 = vsub.f32 %v276, %v257
        %v311 = vsub.f32 %v268, %v258
        %v312 = vsub.f32 %v276, %v259
        %v313 = vmul.f32 %v256, %v309
        %v314 = vmul.f32 %v257, %v310
        %v315 = vmul.f32 %v258, %v311
        %v316 = vmul.f32 %v259, %v312
        %v317 = vsel %vm260, %v315, 0.0
        %v318 = vadd.f32 %v313, %v317
        %v319 = vrot.slane %v318, 4
        %v320 = vadd.f32 %v318, %v319
        %v321 = vrot.slane %v320, 2
        %v322 = vadd.f32 %v320, %v321
        %v323 = vrot.slane %v322, 1
        %v324 = vadd.f32 %v322, %v323
        %v325 = vsel %vm260, %v316, 0.0
        %v326 = vadd.f32 %v314, %v325
        %v327 = vrot.slane %v326, 4
        %v328 = vadd.f32 %v326, %v327
        %v329 = vrot.slane %v328, 2
        %v330 = vadd.f32 %v328, %v329
        %v331 = vrot.slane %v330, 1
        %v332 = vadd.f32 %v330, %v331
        %v333 = vmul.f32 %v278, %v278
        %v334 = vmul.f32 %v280, %v280
        %v335 = vmul.f32 %v324, %v333
        %v336 = vmul.f32 %v332, %v334
        %v337 = vadd.f32 %v268, 1.0
        %v338 = vadd.f32 %v276, 1.0
        %v339 = vrcp.pop %v337
        %v340 = vmul.f32 %v335, %v339
        %v341 = vrcp.pop %v338
        %v342 = vmul.f32 %v336, %v341
        %v343 = vsel %vm240, 1.0, %v256
        %v344 = vsel %vm241, 1.0, %v257
        %v345 = vsel %vm242, 1.0, %v258
        %v346 = vsel %vm243, 1.0, %v259
        %v347 = vsel %vm260, %v345, 0.0
        %v348 = vadd.f32 %v343, %v347
        %v349 = vrot.slane %v348, 4
        %v350 = vadd.f32 %v348, %v349
        %v351 = vrot.slane %v350, 2
        %v352 = vadd.f32 %v350, %v351
        %v353 = vrot.slane %v352, 1
        %v354 = vadd.f32 %v352, %v353
        %v355 = vsel %vm260, %v346, 0.0
        %v356 = vadd.f32 %v344, %v355
        %v357 = vrot.slane %v356, 4
        %v358 = vadd.f32 %v356, %v357
        %v359 = vrot.slane %v358, 2
        %v360 = vadd.f32 %v358, %v359
        %v361 = vrot.slane %v360, 1
        %v362 = vadd.f32 %v360, %v361
        %v363 = vadd.f32 %v343, 1.0
        %v364 = vadd.f32 %v344, 1.0
        %v365 = vadd.f32 %v345, 1.0
        %v366 = vadd.f32 %v346, 1.0
        %v367 = vadd.f32 %v363, %v343
        %v368 = vadd.f32 %v364, %v344
        %v369 = vadd.f32 %v365, %v345
        %v370 = vadd.f32 %v366, %v346
        %v371 = vmul.f32 %v343, %v363
        %v372 = vmul.f32 %v344, %v364
        %v373 = vmul.f32 %v345, %v365
        %v374 = vmul.f32 %v346, %v366
        %v375 = vadd.f32 %v363, 1.0
        %v376 = vadd.f32 %v364, 1.0
        %v377 = vadd.f32 %v365, 1.0
        %v378 = vadd.f32 %v366, 1.0
        %v379 = vmul.f32 %v367, %v375
        %v380 = vmul.f32 %v368, %v376
        %v381 = vmul.f32 %v369, %v377
        %v382 = vmul.f32 %v370, %v378
        %v383 = vadd.f32 %v379, %v371
        %v384 = vadd.f32 %v380, %v372
        %v385 = vadd.f32 %v381, %v373
        %v386 = vadd.f32 %v382, %v374
        %v387 = vmul.f32 %v371, %v375
        %v388 = vmul.f32 %v372, %v376
        %v389 = vmul.f32 %v373, %v377
        %v390 = vmul.f32 %v374, %v378
        %v391 = vadd.f32 %v375, 1.0
        %v392 = vadd.f32 %v376, 1.0
        %v393 = vadd.f32 %v377, 1.0
        %v394 = vadd.f32 %v378, 1.0
        %v395 = vmul.f32 %v383, %v391
        %v396 = vmul.f32 %v384, %v392
        %v397 = vmul.f32 %v385, %v393
        %v398 = vmul.f32 %v386, %v394
        %v399 = vadd.f32 %v395, %v387
        %v400 = vadd.f32 %v396, %v388
        %v401 = vadd.f32 %v397, %v389
        %v402 = vadd.f32 %v398, %v390
        %v403 = vmul.f32 %v387, %v391
        %v404 = vmul.f32 %v388, %v392
        %v405 = vmul.f32 %v389, %v393
        %v406 = vmul.f32 %v390, %v394
        %v407 = vadd.f32 %v391, 1.0
        %v408 = vadd.f32 %v392, 1.0
        %v409 = vadd.f32 %v393, 1.0
        %v410 = vadd.f32 %v394, 1.0
        %v411 = vlog2.pop %v403
        %v412 = vmul.f32 %v411, 0.6931472
        %v413 = vlog2.pop %v404
        %v414 = vmul.f32 %v413, 0.6931472
        %v415 = vlog2.pop %v405
        %v416 = vmul.f32 %v415, 0.6931472
        %v417 = vlog2.pop %v406
        %v418 = vmul.f32 %v417, 0.6931472
        %v419 = vrcp.pop %v403
        %v420 = vmul.f32 %v399, %v419
        %v421 = vrcp.pop %v404
        %v422 = vmul.f32 %v400, %v421
        %v423 = vrcp.pop %v405
        %v424 = vmul.f32 %v401, %v423
        %v425 = vrcp.pop %v406
        %v426 = vmul.f32 %v402, %v425
        %v427 = vlog2.pop %v407
        %v428 = vmul.f32 %v427, 0.6931472
        %v429 = vlog2.pop %v408
        %v430 = vmul.f32 %v429, 0.6931472
        %v431 = vlog2.pop %v409
        %v432 = vmul.f32 %v431, 0.6931472
        %v433 = vlog2.pop %v410
        %v434 = vmul.f32 %v433, 0.6931472
        %v435 = vrcp.pop %v407
        %v436 = vrcp.pop %v408
        %v437 = vrcp.pop %v409
        %v438 = vrcp.pop %v410
        %v439 = vmul.f32 %v435, %v435
        %v440 = vmul.f32 %v436, %v436
        %v441 = vmul.f32 %v437, %v437
        %v442 = vmul.f32 %v438, %v438
        %v443 = vsub.f32 %v407, 0.5
        %v444 = vsub.f32 %v408, 0.5
        %v445 = vsub.f32 %v409, 0.5
        %v446 = vsub.f32 %v410, 0.5
        %v447 = vmul.f32 %v443, %v428
        %v448 = vmul.f32 %v444, %v430
        %v449 = vmul.f32 %v445, %v432
        %v450 = vmul.f32 %v446, %v434
        %v451 = vsub.f32 %v447, %v407
        %v452 = vsub.f32 %v448, %v408
        %v453 = vsub.f32 %v449, %v409
        %v454 = vsub.f32 %v450, %v410
        %v455 = vadd.f32 %v451, 0.9189385
        %v456 = vadd.f32 %v452, 0.9189385
        %v457 = vadd.f32 %v453, 0.9189385
        %v458 = vadd.f32 %v454, 0.9189385
        %v459 = vmul.f32 %v439, 0.0007936508
        %v460 = vmul.f32 %v440, 0.0007936508
        %v461 = vmul.f32 %v441, 0.0007936508
        %v462 = vmul.f32 %v442, 0.0007936508
        %v463 = vsub.f32 0.0027777778, %v459
        %v464 = vsub.f32 0.0027777778, %v460
        %v465 = vsub.f32 0.0027777778, %v461
        %v466 = vsub.f32 0.0027777778, %v462
        %v467 = vmul.f32 %v439, %v463
        %v468 = vmul.f32 %v440, %v464
        %v469 = vmul.f32 %v441, %v465
        %v470 = vmul.f32 %v442, %v466
        %v471 = vsub.f32 0.083333336, %v467
        %v472 = vsub.f32 0.083333336, %v468
        %v473 = vsub.f32 0.083333336, %v469
        %v474 = vsub.f32 0.083333336, %v470
        %v475 = vmul.f32 %v435, %v471
        %v476 = vmul.f32 %v436, %v472
        %v477 = vmul.f32 %v437, %v473
        %v478 = vmul.f32 %v438, %v474
        %v479 = vadd.f32 %v455, %v475
        %v480 = vadd.f32 %v456, %v476
        %v481 = vadd.f32 %v457, %v477
        %v482 = vadd.f32 %v458, %v478
        %v483 = vsub.f32 %v479, %v412
        %v484 = vsub.f32 %v480, %v414
        %v485 = vsub.f32 %v481, %v416
        %v486 = vsub.f32 %v482, %v418
        %v487 = vmul.f32 %v435, 0.5
        %v488 = vmul.f32 %v436, 0.5
        %v489 = vmul.f32 %v437, 0.5
        %v490 = vmul.f32 %v438, 0.5
        %v491 = vsub.f32 %v428, %v487
        %v492 = vsub.f32 %v430, %v488
        %v493 = vsub.f32 %v432, %v489
        %v494 = vsub.f32 %v434, %v490
        %v495 = vmul.f32 %v439, 0.003968254
        %v496 = vmul.f32 %v440, 0.003968254
        %v497 = vmul.f32 %v441, 0.003968254
        %v498 = vmul.f32 %v442, 0.003968254
        %v499 = vsub.f32 0.008333334, %v495
        %v500 = vsub.f32 0.008333334, %v496
        %v501 = vsub.f32 0.008333334, %v497
        %v502 = vsub.f32 0.008333334, %v498
        %v503 = vmul.f32 %v439, %v499
        %v504 = vmul.f32 %v440, %v500
        %v505 = vmul.f32 %v441, %v501
        %v506 = vmul.f32 %v442, %v502
        %v507 = vsub.f32 0.083333336, %v503
        %v508 = vsub.f32 0.083333336, %v504
        %v509 = vsub.f32 0.083333336, %v505
        %v510 = vsub.f32 0.083333336, %v506
        %v511 = vmul.f32 %v439, %v507
        %v512 = vmul.f32 %v440, %v508
        %v513 = vmul.f32 %v441, %v509
        %v514 = vmul.f32 %v442, %v510
        %v515 = vsub.f32 %v491, %v511
        %v516 = vsub.f32 %v492, %v512
        %v517 = vsub.f32 %v493, %v513
        %v518 = vsub.f32 %v494, %v514
        %v519 = vsub.f32 %v515, %v420
        %v520 = vsub.f32 %v516, %v422
        %v521 = vsub.f32 %v517, %v424
        %v522 = vsub.f32 %v518, %v426
        %v523 = vadd.f32 %v354, 1.0
        %v524 = vadd.f32 %v362, 1.0
        %v525 = vadd.f32 %v523, %v354
        %v526 = vadd.f32 %v524, %v362
        %v527 = vmul.f32 %v354, %v523
        %v528 = vmul.f32 %v362, %v524
        %v529 = vadd.f32 %v523, 1.0
        %v530 = vadd.f32 %v524, 1.0
        %v531 = vmul.f32 %v525, %v529
        %v532 = vmul.f32 %v526, %v530
        %v533 = vadd.f32 %v531, %v527
        %v534 = vadd.f32 %v532, %v528
        %v535 = vmul.f32 %v527, %v529
        %v536 = vmul.f32 %v528, %v530
        %v537 = vadd.f32 %v529, 1.0
        %v538 = vadd.f32 %v530, 1.0
        %v539 = vmul.f32 %v533, %v537
        %v540 = vmul.f32 %v534, %v538
        %v541 = vadd.f32 %v539, %v535
        %v542 = vadd.f32 %v540, %v536
        %v543 = vmul.f32 %v535, %v537
        %v544 = vmul.f32 %v536, %v538
        %v545 = vadd.f32 %v537, 1.0
        %v546 = vadd.f32 %v538, 1.0
        %v547 = vlog2.pop %v543
        %v548 = vmul.f32 %v547, 0.6931472
        %v549 = vlog2.pop %v544
        %v550 = vmul.f32 %v549, 0.6931472
        %v551 = vrcp.pop %v543
        %v552 = vmul.f32 %v541, %v551
        %v553 = vrcp.pop %v544
        %v554 = vmul.f32 %v542, %v553
        %v555 = vlog2.pop %v545
        %v556 = vmul.f32 %v555, 0.6931472
        %v557 = vlog2.pop %v546
        %v558 = vmul.f32 %v557, 0.6931472
        %v559 = vrcp.pop %v545
        %v560 = vrcp.pop %v546
        %v561 = vmul.f32 %v559, %v559
        %v562 = vmul.f32 %v560, %v560
        %v563 = vsub.f32 %v545, 0.5
        %v564 = vsub.f32 %v546, 0.5
        %v565 = vmul.f32 %v563, %v556
        %v566 = vmul.f32 %v564, %v558
        %v567 = vsub.f32 %v565, %v545
        %v568 = vsub.f32 %v566, %v546
        %v569 = vadd.f32 %v567, 0.9189385
        %v570 = vadd.f32 %v568, 0.9189385
        %v571 = vmul.f32 %v561, 0.0007936508
        %v572 = vmul.f32 %v562, 0.0007936508
        %v573 = vsub.f32 0.0027777778, %v571
        %v574 = vsub.f32 0.0027777778, %v572
        %v575 = vmul.f32 %v561, %v573
        %v576 = vmul.f32 %v562, %v574
        %v577 = vsub.f32 0.083333336, %v575
        %v578 = vsub.f32 0.083333336, %v576
        %v579 = vmul.f32 %v559, %v577
        %v580 = vmul.f32 %v560, %v578
        %v581 = vadd.f32 %v569, %v579
        %v582 = vadd.f32 %v570, %v580
        %v583 = vsub.f32 %v581, %v548
        %v584 = vsub.f32 %v582, %v550
        %v585 = vmul.f32 %v559, 0.5
        %v586 = vmul.f32 %v560, 0.5
        %v587 = vsub.f32 %v556, %v585
        %v588 = vsub.f32 %v558, %v586
        %v589 = vmul.f32 %v561, 0.003968254
        %v590 = vmul.f32 %v562, 0.003968254
        %v591 = vsub.f32 0.008333334, %v589
        %v592 = vsub.f32 0.008333334, %v590
        %v593 = vmul.f32 %v561, %v591
        %v594 = vmul.f32 %v562, %v592
        %v595 = vsub.f32 0.083333336, %v593
        %v596 = vsub.f32 0.083333336, %v594
        %v597 = vmul.f32 %v561, %v595
        %v598 = vmul.f32 %v562, %v596
        %v599 = vsub.f32 %v587, %v597
        %v600 = vsub.f32 %v588, %v598
        %v601 = vsub.f32 %v599, %v552
        %v602 = vsub.f32 %v600, %v554
        %v603 = vsub.f32 %v343, 1.0
        %v604 = vsub.f32 %v344, 1.0
        %v605 = vsub.f32 %v345, 1.0
        %v606 = vsub.f32 %v346, 1.0
        %v607 = vsub.f32 %v519, %v601
        %v608 = vsub.f32 %v520, %v602
        %v609 = vsub.f32 %v521, %v601
        %v610 = vsub.f32 %v522, %v602
        %v611 = vmul.f32 %v603, %v607
        %v612 = vmul.f32 %v604, %v608
        %v613 = vmul.f32 %v605, %v609
        %v614 = vmul.f32 %v606, %v610
        %v615 = vsub.f32 %v611, %v483
        %v616 = vsub.f32 %v612, %v484
        %v617 = vsub.f32 %v613, %v485
        %v618 = vsub.f32 %v614, %v486
        %v619 = vsel %vm260, %v617, 0.0
        %v620 = vadd.f32 %v615, %v619
        %v621 = vrot.slane %v620, 4
        %v622 = vadd.f32 %v620, %v621
        %v623 = vrot.slane %v622, 2
        %v624 = vadd.f32 %v622, %v623
        %v625 = vrot.slane %v624, 1
        %v626 = vadd.f32 %v624, %v625
        %v627 = vsel %vm260, %v618, 0.0
        %v628 = vadd.f32 %v616, %v627
        %v629 = vrot.slane %v628, 4
        %v630 = vadd.f32 %v628, %v629
        %v631 = vrot.slane %v630, 2
        %v632 = vadd.f32 %v630, %v631
        %v633 = vrot.slane %v632, 1
        %v634 = vadd.f32 %v632, %v633
        %v635 = vadd.f32 %v626, %v583
        %v636 = vadd.f32 %v634, %v584
        %v637 = vsub.f32 %v635, 12.801827
        %v638 = vsub.f32 %v636, 12.801827
        %v639 = vadd.f32 %v300, %v340
        %v640 = vadd.f32 %v308, %v342
        %v641 = vstv %s223
        %v642 = vmul.f32 %v641, %v637
        %v643 = vmul.f32 %v641, %v638
        %v644 = vadd.f32 %v639, %v642
        %v645 = vadd.f32 %v640, %v643
        %v646 = vld [vmem:[%s201] sm:$0xff]
        %v647 = vld [vmem:[%s201 + $0x8] sm:$0xff]
        %v648 = vadd.f32 %v646, %v644
        %v649 = vadd.f32 %v647, %v645
        %650 = vst [vmem:[%s201] sm:$0xff] %v648
        %651 = vst [vmem:[%s201 + $0x8] sm:$0xff] %v649
        %s652 = sand.u32 %s113, 1
        %s653 = scalar_lea.sflag [#allocation4], %s652
        %s654 = sand.u32 %s113, 1
        %s655 = smul.addr %s654, 16
        %s656 = scalar_lea.vmem [#allocation3], %s655
        // Predicated region
        $region37: #{tpu_custom_call.1} parent=31 // pred_check
          %p657 = pneg %p123
        $region38: #{tpu_custom_call.1} parent=31 // pred_check_branch
          %659 = sbr.rel (%p657) target = $region40
        $region39: #{tpu_custom_call.1} parent=31 // pred_region
          %s661 = ssub.s32 256, 256
          %662 = vsyncadd %s653, %s661
          %s663 = smul.addr %s22, 2
          %s664 = smul.addr %s663, 128
          %s665 = scalar_lea.hbm %s3, %s664
          %s667 = sshll.u32 %s656, 4
          %s668 = int_to_ptr.vmem [resolvable:$true] %s667
          %670 = dma.vmem_to_hbm [thread:$0]  %s668, 256, %s665, %s653
        $region40: #{tpu_custom_call.1} parent=31 // pred_fallthru
          _
      $region32: #{tpu_custom_call.1} parent=5 // pred_fallthru
        _
      %p671 = scmp.le.s32.totalorder 2, %s13
      // Predicated region
      $region41: #{tpu_custom_call.1} parent=5 // pred_check
        %p672 = pneg %p671
      $region42: #{tpu_custom_call.1} parent=5 // pred_check_branch
        %674 = sbr.rel (%p672) target = $region44
      $region43: #{tpu_custom_call.1} parent=5 // pred_region
        %s675 = ssub.s32 %s13, 2
        // Predicated region
        $region45: #{tpu_custom_call.1} parent=43 // pred_check
          %p676 = pneg %p129
        $region46: #{tpu_custom_call.1} parent=43 // pred_check_branch
          %678 = sbr.rel (%p676) target = $region48
        $region47: #{tpu_custom_call.1} parent=43 // pred_region
          %s679 = sand.u32 %s114, 1
          %s680 = scalar_lea.sflag [#allocation4], %s679
          %s681 = sand.u32 %s114, 1
          %s682 = smul.addr %s681, 16
          %s683 = scalar_lea.vmem [#allocation3], %s682
          %684 = dma.done %s680, 256
        $region48: #{tpu_custom_call.1} parent=43 // pred_fallthru
          _
      $region44: #{tpu_custom_call.1} parent=5 // pred_fallthru
        _
    $region6: #{tpu_custom_call.1} parent=1 // loop_footer
      %s17 = sadd.s32 1, %s13
    $region7: #{tpu_custom_call.1} parent=1 // loop_footer_branch
      %12 = sbr.rel target = $region3
    $region8: #{tpu_custom_call.1} parent=1 // loop_exit
      _
    %685 = vsyncpa [#allocation4], 1
    %s686 = scalar_lea.sflag [#allocation4], 1
    %687 = vsyncpa %s686, 1

</llo_original>
